<compile_context>
chip_gen: v7x
topology: tpu7x:2x2x1
jax: 0.10.0
libtpu: 0.0.40
codegen_flags: <defaults>
</compile_context>

<pallas_src>
import jax
import jax.numpy as jnp
from jax.experimental import pallas as pl
from jax.experimental.pallas import tpu as pltpu


# ---------------------------------------------------------------------------
# Kernel bodies
# ---------------------------------------------------------------------------

def _linear_cat_kernel(x_ref, w_ref, b_ref, o_ref, acc_ref):
    """General K-tiled path.  Grid = (grid_m, num_sub, grid_n, grid_k).

    x_ref: (tm, tk)   w_ref: (tk, tn)   b_ref: (1, tn)
    o_ref: (tm, tn)   acc_ref: (tm, tn) f32 scratch
    """
    k = pl.program_id(3)
    prod = jnp.dot(x_ref[...], w_ref[...], preferred_element_type=jnp.float32)

    @pl.when(k == 0)
    def _():
        acc_ref[...] = prod            # overwrite: no zero-fill + RMW on step 0

    @pl.when(k > 0)
    def _():
        acc_ref[...] += prod

    @pl.when(k == pl.num_programs(3) - 1)
    def _():
        o_ref[...] = (acc_ref[...]
                      + b_ref[...].astype(jnp.float32)).astype(o_ref.dtype)


def _linear_cat_kernel_single_k(x_ref, w_ref, b_ref, o_ref):
    """Fast path when the whole K dimension fits in one tile (grid_k == 1)."""
    o_ref[...] = (
        jnp.dot(x_ref[...], w_ref[...], preferred_element_type=jnp.float32)
        + b_ref[...].astype(jnp.float32)
    ).astype(o_ref.dtype)


# ---------------------------------------------------------------------------
# Helpers
# ---------------------------------------------------------------------------

def _cdiv(a, b):
    return -(-a // b)


def _round_up(a, b):
    return _cdiv(a, b) * b


def _largest_aligned_divisor(dim, preferred, aligns=(256, 128)):
    """Largest divisor of `dim` that is <= preferred and a multiple of one of
    `aligns` (tried in order -- 256 first to match v6e/v7x MXU passes)."""
    for align in aligns:
        t = (preferred // align) * align
        while t >= align:
            if dim % t == 0:
                return t
            t -= align
    return None


def _physical_vmem_bytes():
    try:
        info = pltpu.get_tpu_info()
        v = getattr(info, "vmem_capacity_bytes", None)
        if v:
            return int(v)
    except Exception:
        pass
    return 64 << 20   # conservative default = v7x per-TC VMEM


# ---------------------------------------------------------------------------
# Wrapper: ModuleCat over `num_sub` Linear sub-modules
# ---------------------------------------------------------------------------

def module_cat_linear(x2d, weights, biases, *, cat_dim=1, out_dtype=None,
                      tm=512, tn=512, tk=512):
    """ModuleCat forward for Linear sub-modules, concat along `cat_dim`.

    x2d:     (M, K)            flattened activations (any float dtype; the
                               kernel computes in this dtype with f32 acc)
    weights: (num_sub, K, N)   W_i^T per sub-module (store bf16 for bf16 path)
    biases:  (num_sub, N)
    cat_dim: 1 -> feature concat (dim=-1); 0 -> row/batch concat (dim=0).
    """
    num_sub, K, N = weights.shape
    M, Kx = x2d.shape
    assert Kx == K, "x feature dim must match weight K"
    out_dtype = out_dtype or x2d.dtype

    in_sz = jnp.dtype(x2d.dtype).itemsize
    w_sz = jnp.dtype(weights.dtype).itemsize
    b_sz = jnp.dtype(biases.dtype).itemsize
    out_sz = jnp.dtype(out_dtype).itemsize
    align_m = 16 if in_sz < 4 else 8      # bf16 packs two rows per sublane

    # ------------------------------------------------------------------ tiles
    # K: must tile exactly (a ragged reduction block would accumulate garbage).
    k_pad = 0
    if K <= tk:
        tk_c = K                                   # block == full dim (allowed)
    else:
        d = _largest_aligned_divisor(K, tk)
        if d is not None:
            tk_c = d
        else:
            # Rare: large non-factorable K.  Pad once with zeros (exact for the
            # matmul) rather than blowing VMEM with tk == K.
            tk_c = tk
            k_pad = (-K) % tk_c

    # N: must tile exactly so the fused column-concat layout is contiguous.
    if N <= tn:
        tn_c = N
    else:
        tn_c = _largest_aligned_divisor(N, tn) or N

    # M: ragged trailing block is safe (not a reduction axis; OOB writes drop).
    tm_c = M if M <= tm else tm

    grid_n = N // tn_c
    grid_k = (K + k_pad) // tk_c
    grid_m = _cdiv(M, tm_c)

    flops = 2 * M * K * N * num_sub
    bytes_accessed = (M * K * in_sz + num_sub * K * N * w_sz
                      + num_sub * N * b_sz + M * num_sub * N * out_sz)

    # v7x dual-TC consideration: if every "parallel" grid axis collapsed to a
    # single block and the problem is compute-bound, split M so both cores work.
    if (grid_m * num_sub * grid_n == 1 and M >= 2 * align_m
            and flops > 400 * bytes_accessed):
        tm_c = _round_up(_cdiv(M, 2), align_m)
        grid_m = _cdiv(M, tm_c)

    fast = (grid_k == 1)

    # ------------------------------------------------------------- VMEM budget
    phys_vmem = _physical_vmem_bytes()
    vmem_budget = min(int(0.75 * phys_vmem), 96 << 20)   # ~48 MiB cap on v7x

    def _need(tm_, tn_, tk_):
        n = 2 * (tm_ * tk_ * in_sz + tk_ * tn_ * w_sz
                 + tn_ * b_sz + tm_ * tn_ * out_sz)
        if not fast:
            n += tm_ * tn_ * 4                       # f32 accumulator scratch
        return n

    while _need(tm_c, tn_c, tk_c) > vmem_budget and tm_c > align_m:
        tm_c = max(align_m, _round_up(tm_c // 2, align_m))
        grid_m = _cdiv(M, tm_c)

    vmem_limit = min(max(int(1.5 * _need(tm_c, tn_c, tk_c)) + (4 << 20),
                         16 << 20),
                     vmem_budget)

    # ------------------------------------------------------------- K padding
    if k_pad:
        x2d = jnp.pad(x2d, ((0, 0), (0, k_pad)))
        weights = jnp.pad(weights, ((0, 0), (0, k_pad), (0, 0)))

    # Bias reshaped to (num_sub, 1, N) so its block satisfies the (8,128) rule;
    # this reshape is metadata-only (tiny array, no HBM pass of note).
    b3 = biases.reshape(num_sub, 1, N)

    # Fused (M, num_sub*N) output needs tn_c-aligned column blocks; otherwise
    # fall back to a per-sub 3-D output.
    fused_out = (cat_dim != 0) and (num_sub == 1 or tn_c % 128 == 0)

    # --------------------------------------------------------------- specs
    if fast:
        grid = (grid_m, num_sub, grid_n)
        x_map = lambda i, s, j: (i, 0)
        w_map = lambda i, s, j: (s, 0, j)
        b_map = lambda i, s, j: (s, 0, j)
        if fused_out:
            o_map = lambda i, s, j: (i, s * grid_n + j)
        else:
            o_map = lambda i, s, j: (s, i, j)
        kernel = _linear_cat_kernel_single_k
        scratch = []
        dim_sem = ("parallel", "parallel", "parallel")
    else:
        grid = (grid_m, num_sub, grid_n, grid_k)
        x_map = lambda i, s, j, k: (i, k)
        w_map = lambda i, s, j, k: (s, k, j)
        b_map = lambda i, s, j, k: (s, 0, j)
        if fused_out:
            o_map = lambda i, s, j, k: (i, s * grid_n + j)
        else:
            o_map = lambda i, s, j, k: (s, i, j)
        kernel = _linear_cat_kernel
        scratch = [pltpu.VMEM((tm_c, tn_c), jnp.float32)]
        dim_sem = ("parallel", "parallel", "parallel", "arbitrary")

    if fused_out:
        out_shape_ = (M, num_sub * N)
        out_block = (tm_c, tn_c)
    else:
        out_shape_ = (num_sub, M, N)
        out_block = (None, tm_c, tn_c)

    cost = pl.CostEstimate(flops=flops, transcendentals=0,
                           bytes_accessed=bytes_accessed)

    out = pl.pallas_call(
        kernel,
        out_shape=jax.ShapeDtypeStruct(out_shape_, out_dtype),
        grid_spec=pltpu.PrefetchScalarGridSpec(
            num_scalar_prefetch=0,
            grid=grid,
            in_specs=[
                pl.BlockSpec((tm_c, tk_c), x_map),          # activations tile
                pl.BlockSpec((None, tk_c, tn_c), w_map),     # per-sub W tile
                pl.BlockSpec((None, 1, tn_c), b_map),        # per-sub bias
            ],
            out_specs=pl.BlockSpec(out_block, o_map),
            scratch_shapes=scratch,
        ),
        compiler_params=pltpu.CompilerParams(
            dimension_semantics=dim_sem,
            vmem_limit_bytes=vmem_limit),
        cost_estimate=cost,
    )(x2d, weights, b3)

    # ------------------------------------------------------------- post-layout
    if cat_dim == 0:
        # (num_sub, M, N) -> (num_sub*M, N): contiguous reshape, no HBM shuffle.
        out = out.reshape(num_sub * M, N)
    elif not fused_out:
        # TODO(synk): rare fallback (N not a multiple of 128 with num_sub > 1)
        # needs a wrapper-side column shuffle; the common case never hits this.
        out = jnp.transpose(out, (1, 0, 2)).reshape(M, num_sub * N)
    return out


# ---------------------------------------------------------------------------
# Demo / correctness check
# ---------------------------------------------------------------------------

if __name__ == "__main__":
    # batch=2, seq=8, hidden=32, per-sub-module out_features=128, 2 sub-modules.
    B, S, H, N, NUM_SUB = 2, 8, 32, 128, 2

    key = jax.random.PRNGKey(0)
    kx, kw, kb = jax.random.split(key, 3)

    x = jax.random.normal(kx, (B, S, H), dtype=jnp.float32)
    # PyTorch Linear weight is (N, H); we store the transposed (H, N) form,
    # stacked over sub-modules.
    weights = 0.02 * jax.random.normal(kw, (NUM_SUB, H, N), dtype=jnp.float32)
    biases = 0.1 * jax.random.normal(kb, (NUM_SUB, N), dtype=jnp.float32)

    x2d = x.reshape(B * S, H)
    M = B * S

    # Pure-JAX reference: cat([x @ W_i + b_i for i], dim=-1)
    ref = jnp.concatenate(
        [x2d @ weights[i] + biases[i] for i in range(NUM_SUB)], axis=-1)

    # --- dim=-1 (feature concat), f32 operands, single-K fast path ---------
    out = module_cat_linear(x2d, weights, biases, cat_dim=1)
    jax.block_until_ready(out)
    assert out.shape == (M, NUM_SUB * N)
    assert jnp.allclose(out, ref, atol=1e-5, rtol=1e-5)

    # --- bf16-STORED operands (f32 accumulation in-kernel) -----------------
    # The casts below model parameter storage, not a hot-path wrapper op.
    out_bf = module_cat_linear(x2d.astype(jnp.bfloat16),
                               weights.astype(jnp.bfloat16),
                               biases, cat_dim=1, out_dtype=jnp.float32)
    jax.block_until_ready(out_bf)
    assert jnp.allclose(out_bf, ref, atol=2e-2, rtol=2e-2)

    # --- ModuleCat default dim=0 (row/batch concat), handled in out_spec ----
    out0 = module_cat_linear(x2d, weights, biases, cat_dim=0)
    jax.block_until_ready(out0)
    ref0 = jnp.concatenate(
        [x2d @ weights[i] + biases[i] for i in range(NUM_SUB)], axis=0)
    assert out0.shape == (NUM_SUB * M, N)
    assert jnp.allclose(out0, ref0, atol=1e-5, rtol=1e-5)

    # --- exercise the general K-tiled (accumulator) path with K=256, tk=128 -
    H2 = 256
    kx2, kw2, kb2 = jax.random.split(jax.random.PRNGKey(1), 3)
    x2 = jax.random.normal(kx2, (M, H2), dtype=jnp.float32)
    w2 = 0.02 * jax.random.normal(kw2, (NUM_SUB, H2, N), dtype=jnp.float32)
    b2 = 0.1 * jax.random.normal(kb2, (NUM_SUB, N), dtype=jnp.float32)
    ref2 = jnp.concatenate(
        [x2 @ w2[i] + b2[i] for i in range(NUM_SUB)], axis=-1)
    out2 = module_cat_linear(x2, w2, b2, cat_dim=1, tk=128)   # grid_k = 2
    jax.block_until_ready(out2)
    assert jnp.allclose(out2, ref2, atol=1e-4, rtol=1e-4)

    print("KERNEL_OK")
</pallas_src>

<mosaic_0001>
module attributes {stable_mosaic.version = 11 : i64} {
  func.func @_linear_cat_kernel_single_k(%arg0: i32, %arg1: i32, %arg2: i32, %arg3: memref<16x32xf32, #tpu.memory_space<vmem>>, %arg4: memref<1x32x128xf32, #tpu.memory_space<vmem>>, %arg5: memref<1x1x128xf32, #tpu.memory_space<vmem>>, %arg6: memref<16x128xf32, #tpu.memory_space<vmem>>) attributes {dimension_semantics = [#tpu.dimension_semantics<parallel>, #tpu.dimension_semantics<parallel>, #tpu.dimension_semantics<parallel>], iteration_bounds = array<i64: 1, 2, 1>, scalar_prefetch = 0 : i64, scratch_operands = 0 : i64, tpu.core_type = #tpu.core_type<tc>, window_params = [{transform_indices = @transform_0, window_bounds = array<i64: 16, 32>}, {transform_indices = @transform_1, window_bounds = array<i64: 1, 32, 128>}, {transform_indices = @transform_2, window_bounds = array<i64: 1, 1, 128>}, {transform_indices = @transform_3, window_bounds = array<i64: 16, 128>}]} {
    %c0 = arith.constant 0 : index
    %c0_0 = arith.constant 0 : index
    %0 = vector.load %arg3[%c0, %c0_0] : memref<16x32xf32, #tpu.memory_space<vmem>>, vector<16x32xf32>
    %c0_1 = arith.constant 0 : index
    %c0_2 = arith.constant 0 : index
    %c0_3 = arith.constant 0 : index
    %1 = vector.load %arg4[%c0_1, %c0_2, %c0_3] : memref<1x32x128xf32, #tpu.memory_space<vmem>>, vector<1x32x128xf32>
    %2 = vector.shape_cast %1 : vector<1x32x128xf32> to vector<32x128xf32>
    %cst = arith.constant dense<0.000000e+00> : vector<16x128xf32>
    %3 = tpu.matmul %0, %2, %cst {dimension_numbers = #tpu.dot_dimension_numbers<[1], [0], [0], [1], [0, 0, 1, 1], [], []>} : vector<16x32xf32>, vector<32x128xf32>, vector<16x128xf32> -> vector<16x128xf32>
    %c0_4 = arith.constant 0 : index
    %c0_5 = arith.constant 0 : index
    %c0_6 = arith.constant 0 : index
    %4 = vector.load %arg5[%c0_4, %c0_5, %c0_6] : memref<1x1x128xf32, #tpu.memory_space<vmem>>, vector<1x1x128xf32>
    %5 = vector.shape_cast %4 : vector<1x1x128xf32> to vector<1x128xf32>
    %6 = vector.broadcast %5 : vector<1x128xf32> to vector<16x128xf32>
    %7 = arith.addf %3, %6 : vector<16x128xf32>
    %c0_7 = arith.constant 0 : index
    %c0_8 = arith.constant 0 : index
    %8 = vector.load %arg6[%c0_7, %c0_8] : memref<16x128xf32, #tpu.memory_space<vmem>>, vector<16x128xf32>
    tpu.vector_store %arg6[%c0_7, %c0_8], %7 {strides = array<i32>} : memref<16x128xf32, #tpu.memory_space<vmem>>, vector<16x128xf32>,
    return
  }
  func.func @transform_0(%arg0: i32, %arg1: i32, %arg2: i32) -> (i32, i32) {
    %c0_i32 = arith.constant 0 : i32
    %c0_i32_0 = arith.constant 0 : i32
    return %arg0, %c0_i32 : i32, i32
  }
  func.func @transform_1(%arg0: i32, %arg1: i32, %arg2: i32) -> (i32, i32, i32) {
    %c0_i32 = arith.constant 0 : i32
    %c0_i32_0 = arith.constant 0 : i32
    return %arg1, %c0_i32, %arg2 : i32, i32, i32
  }
  func.func @transform_2(%arg0: i32, %arg1: i32, %arg2: i32) -> (i32, i32, i32) {
    %c0_i32 = arith.constant 0 : i32
    %c0_i32_0 = arith.constant 0 : i32
    return %arg1, %c0_i32, %arg2 : i32, i32, i32
  }
  func.func @transform_3(%arg0: i32, %arg1: i32, %arg2: i32) -> (i32, i32) {
    %c1_i32 = arith.constant 1 : i32
    %0 = arith.muli %arg1, %c1_i32 : i32
    %1 = arith.addi %0, %arg2 : i32
    %c0_i32 = arith.constant 0 : i32
    return %arg0, %1 : i32, i32
  }
}

</mosaic_0001>

<llo_original>
// kernel: tpu_custom_call.1
$region0: #{tpu_custom_call.1}
  #allocation0 [shape = 'u32[]', space=smem, size = 0x4, offset = 0x4, fixed_abs, tag = 'smem constant byte address 0x4 - core index']
  #allocation1 [shape = 'u32[144,128]{1,0:T(1,128)}', space=vmem, size = 0x12000, scoped, tag = 'internal scratch']
  %s0 = inlined_call_operand.hbm [shape: f32[16,32], index: 0, kind: input, shape index: {}]
  %s1 = inlined_call_operand.hbm [shape: f32[2,32,128], index: 1, kind: input, shape index: {}]
  %s2 = inlined_call_operand.vmem [shape: f32[2,1,128], index: 2, kind: input, shape index: {}]
  %s3 = inlined_call_operand.hbm [shape: f32[16,256], index: 3, kind: output, shape index: {}]
  %s4 = sld [smem:[#allocation0]]
  $region53: #{tpu_custom_call.1} parent=0
    _
  %s6 = ssub.s32 1, %s4
  %s7 = scalar_select 0, %s6, %s4
  $region1: #{tpu_custom_call.1} parent=0
    #allocation2 [shape = 'u8[8192]{0}', space=vmem, size = 0x2000, scoped, tag = 'input window, operand 0, single buffered']
    #allocation3 [shape = 's32[2]{0}', space=sflag, size = 0x8, scoped, tag = 'scoped memory for tpu_custom_call.1']
    #allocation4 [shape = 's32[2]{0}', space=sflag, size = 0x8, scoped, tag = 'scoped memory for tpu_custom_call.1']
    #allocation5 [shape = 'u8[32768]{0}', space=vmem, size = 0x8000, scoped, tag = 'input window, operand 1']
    #allocation6 [shape = 's32[2]{0}', space=sflag, size = 0x8, scoped, tag = 'scoped memory for tpu_custom_call.1']
    #allocation7 [shape = 'u8[16384]{0}', space=vmem, size = 0x4000, scoped, tag = 'output window, operand 0']
    %8 = vsyncpa [#allocation3], 0
    %9 = vsyncpa [#allocation6], 0
    %s10 = scalar_lea.sflag [#allocation6], 1
    %11 = vsyncpa %s10, 0
    %12 = vsyncpa [#allocation4], 0
    %s13 = scalar_lea.sflag [#allocation4], 1
    %14 = vsyncpa %s13, 0
    loop: start=0, step=1, limit=4
    $region2: #{tpu_custom_call.1} parent=1 // loop_pre_header
      _
    $region3: #{tpu_custom_call.1} parent=1 // loop_header
      %s16 = sphi 0, %s20
      %p17 = scmp.ge.s32.totalorder %s16, 4
      %s23 = sphi 0, %s42
      %s24 = sphi 0, %s38
      %s25 = sphi 0, %s34
      %s26 = sphi 0, %s23
      %s27 = sphi 0, %s24
      %s28 = sphi 0, %s25
      %s29 = sphi 0, %s26
      %s30 = sphi 0, %s27
      %s31 = sphi 0, %s28
      %s45 = sphi 0, %s47
      %s48 = sphi 0, %s45
      %s49 = sphi 0, %s48
      %s65 = sphi 0, %s49
      %s73 = sphi 0, %s75
      %s76 = sphi 0, %s73
      %s77 = sphi 0, %s76
      %s93 = sphi 0, %s77
      %s101 = sphi 0, %s103
      %s104 = sphi 0, %s101
      %s105 = sphi 0, %s104
      %s121 = sphi 0, %s105
      %s131 = sphi 0, %s133
      %s134 = sphi 0, %s131
      %s135 = sphi 0, %s134
      %s151 = sphi 0, %s135
    $region4: #{tpu_custom_call.1} parent=1 // loop_header_branch
      %19 = sbr.rel (%p17) target = $region8
    $region5: #{tpu_custom_call.1} parent=1 // loop_body
      %s21 = ssub.s32 %s16, 1
      %s22 = ssub.s32 %s16, 2
      %s32 = sadd.s32 1, %s25
      %p33 = scmp.ge.s32.totalorder %s32, 1
      %s34 = scalar_select %p33, 0, %s32
      %s35 = sadd.s32 1, %s24
      %s36 = scalar_select %p33, %s35, %s24
      %p37 = scmp.ge.s32.totalorder %s36, 2
      %s38 = scalar_select %p37, 0, %s36
      %s39 = sadd.s32 1, %s23
      %s40 = scalar_select %p37, %s39, %s23
      %p41 = scmp.ge.s32.totalorder %s40, 1
      %s42 = scalar_select %p41, 0, %s40
      %s43 = ssub.s32 %s23, %s42
      %p44 = scmp.eq.s32.totalorder %s43, 0
      %s46 = sadd.s32 %s45, 1
      %s47 = scalar_select %p44, %s45, %s46
      %p50 = pneg %p44
      %p51 = scmp.eq.s32.totalorder %s16, 1
      %p52 = por %p50, %p51
      %p53 = scmp.ne.s32.totalorder %s45, %s48
      %p54 = scmp.eq.s32.totalorder %s16, 0
      %p55 = por %p53, %p54
      %p56 = scmp.ne.s32.totalorder %s45, %s48
      %p57 = scmp.eq.s32.totalorder %s21, 1
      %p58 = por %p56, %p57
      %p59 = scmp.ne.s32.totalorder %s48, %s49
      %p60 = scmp.eq.s32.totalorder %s21, 0
      %p61 = por %p59, %p60
      %p62 = scmp.ne.s32.totalorder %s48, %s49
      %p63 = scmp.eq.s32.totalorder %s22, 1
      %p64 = por %p62, %p63
      %p66 = scmp.ne.s32.totalorder %s49, %s65
      %p67 = scmp.eq.s32.totalorder %s22, 0
      %p68 = por %p66, %p67
      %s69 = ssub.s32 %s24, %s38
      %s70 = ssub.s32 %s25, %s34
      %s71 = sor.u32 %s69, %s70
      %p72 = scmp.eq.s32.totalorder %s71, 0
      %s74 = sadd.s32 %s73, 1
      %s75 = scalar_select %p72, %s73, %s74
      %p78 = pneg %p72
      %p79 = scmp.eq.s32.totalorder %s16, 1
      %p80 = por %p78, %p79
      %p81 = scmp.ne.s32.totalorder %s73, %s76
      %p82 = scmp.eq.s32.totalorder %s16, 0
      %p83 = por %p81, %p82
      %p84 = scmp.ne.s32.totalorder %s73, %s76
      %p85 = scmp.eq.s32.totalorder %s21, 1
      %p86 = por %p84, %p85
      %p87 = scmp.ne.s32.totalorder %s76, %s77
      %p88 = scmp.eq.s32.totalorder %s21, 0
      %p89 = por %p87, %p88
      %p90 = scmp.ne.s32.totalorder %s76, %s77
      %p91 = scmp.eq.s32.totalorder %s22, 1
      %p92 = por %p90, %p91
      %p94 = scmp.ne.s32.totalorder %s77, %s93
      %p95 = scmp.eq.s32.totalorder %s22, 0
      %p96 = por %p94, %p95
      %s97 = ssub.s32 %s24, %s38
      %s98 = ssub.s32 %s25, %s34
      %s99 = sor.u32 %s97, %s98
      %p100 = scmp.eq.s32.totalorder %s99, 0
      %s102 = sadd.s32 %s101, 1
      %s103 = scalar_select %p100, %s101, %s102
      %p106 = pneg %p100
      %p107 = scmp.eq.s32.totalorder %s16, 1
      %p108 = por %p106, %p107
      %p109 = scmp.ne.s32.totalorder %s101, %s104
      %p110 = scmp.eq.s32.totalorder %s16, 0
      %p111 = por %p109, %p110
      %p112 = scmp.ne.s32.totalorder %s101, %s104
      %p113 = scmp.eq.s32.totalorder %s21, 1
      %p114 = por %p112, %p113
      %p115 = scmp.ne.s32.totalorder %s104, %s105
      %p116 = scmp.eq.s32.totalorder %s21, 0
      %p117 = por %p115, %p116
      %p118 = scmp.ne.s32.totalorder %s104, %s105
      %p119 = scmp.eq.s32.totalorder %s22, 1
      %p120 = por %p118, %p119
      %p122 = scmp.ne.s32.totalorder %s105, %s121
      %p123 = scmp.eq.s32.totalorder %s22, 0
      %p124 = por %p122, %p123
      %s125 = sadd.s32 %s24, %s25
      %s126 = sadd.s32 %s38, %s34
      %s127 = ssub.s32 %s23, %s42
      %s128 = ssub.s32 %s125, %s126
      %s129 = sor.u32 %s127, %s128
      %p130 = scmp.eq.s32.totalorder %s129, 0
      %s132 = sadd.s32 %s131, 1
      %s133 = scalar_select %p130, %s131, %s132
      %p136 = pneg %p130
      %p137 = scmp.eq.s32.totalorder %s16, 1
      %p138 = por %p136, %p137
      %p139 = scmp.ne.s32.totalorder %s131, %s134
      %p140 = scmp.eq.s32.totalorder %s16, 0
      %p141 = por %p139, %p140
      %p142 = scmp.ne.s32.totalorder %s131, %s134
      %p143 = scmp.eq.s32.totalorder %s21, 1
      %p144 = por %p142, %p143
      %p145 = scmp.ne.s32.totalorder %s134, %s135
      %p146 = scmp.eq.s32.totalorder %s21, 0
      %p147 = por %p145, %p146
      %p148 = scmp.ne.s32.totalorder %s134, %s135
      %p149 = scmp.eq.s32.totalorder %s22, 1
      %p150 = por %p148, %p149
      %p152 = scmp.ne.s32.totalorder %s135, %s151
      %p153 = scmp.eq.s32.totalorder %s22, 0
      %p154 = por %p152, %p153
      %p155 = scmp.le.s32.totalorder 1, %s16
      %p156 = scmp.lt.s32.totalorder %s16, 3
      %p157 = pnand %p155, %p156
      %p158 = pneg %p157
      // Predicated region
      $region9: #{tpu_custom_call.1} parent=5 // pred_check
        _
      $region10: #{tpu_custom_call.1} parent=5 // pred_check_branch
        %160 = sbr.rel (%p157) target = $region12
      $region11: #{tpu_custom_call.1} parent=5 // pred_region
        %s161 = ssub.s32 %s16, 1
        // Predicated region
        $region13: #{tpu_custom_call.1} parent=11 // pred_check
          %p162 = pneg %p61
        $region14: #{tpu_custom_call.1} parent=11 // pred_check_branch
          %164 = sbr.rel (%p162) target = $region16
        $region15: #{tpu_custom_call.1} parent=11 // pred_region
          %s165 = smul.u32 2, %s26
          %s167 = ssub.s32 256, 256
          %168 = vsyncadd [#allocation3], %s167
          %s169 = smul.addr %s165, 128
          %s170 = scalar_lea.hbm %s0, %s169
          %s171 = sshll.u32 [#allocation2], 4
          %s172 = int_to_ptr.vmem [resolvable:$true] %s171
          %177 = dma.hbm_to_vmem [thread:$0]  %s170, 256, %s172, [#allocation3], 128, 128, 8
        $region16: #{tpu_custom_call.1} parent=11 // pred_fallthru
          _
      $region12: #{tpu_custom_call.1} parent=5 // pred_fallthru
        _
      %p178 = scmp.lt.s32.totalorder %s16, 2
      // Predicated region
      $region17: #{tpu_custom_call.1} parent=5 // pred_check
        %p179 = pneg %p178
      $region18: #{tpu_custom_call.1} parent=5 // pred_check_branch
        %181 = sbr.rel (%p179) target = $region20
      $region19: #{tpu_custom_call.1} parent=5 // pred_region
        // Predicated region
        $region21: #{tpu_custom_call.1} parent=19 // pred_check
          %p182 = pneg %p83
        $region22: #{tpu_custom_call.1} parent=19 // pred_check_branch
          %184 = sbr.rel (%p182) target = $region24
        $region23: #{tpu_custom_call.1} parent=19 // pred_region
          %s185 = sand.u32 %s73, 1
          %s186 = scalar_lea.sflag [#allocation6], %s185
          %s187 = sand.u32 %s73, 1
          %s188 = smul.addr %s187, 32
          %s189 = scalar_lea.vmem [#allocation5], %s188
          %s191 = ssub.s32 512, 512
          %192 = vsyncadd %s186, %s191
          %s193 = smul.addr %s24, 4
          %s194 = sadd.s32 %s25, %s193
          %s195 = smul.addr %s194, 128
          %s196 = scalar_lea.hbm %s1, %s195
          %s197 = sshll.u32 %s189, 4
          %s198 = int_to_ptr.vmem [resolvable:$true] %s197
          %203 = dma.hbm_to_vmem [thread:$0]  %s196, 512, %s198, %s186, 128, 128, 8
        $region24: #{tpu_custom_call.1} parent=19 // pred_fallthru
          _
        // Predicated region
        $region25: #{tpu_custom_call.1} parent=19 // pred_check
          %p204 = pneg %p111
        $region26: #{tpu_custom_call.1} parent=19 // pred_check_branch
          %206 = sbr.rel (%p204) target = $region28
        $region27: #{tpu_custom_call.1} parent=19 // pred_region
          %p207 = scmp.lt.s32.totalorder %s24, 1
          %s208 = scalar_select %p207, %s24, 1
          %p209 = scmp.lt.s32.totalorder %s25, 0
          %s210 = scalar_select %p209, %s25, 0
          %s211 = sadd.s32 %s210, %s208
          %s212 = scalar_lea.vmem %s2, %s211
        $region28: #{tpu_custom_call.1} parent=19 // pred_fallthru
          _
      $region20: #{tpu_custom_call.1} parent=5 // pred_fallthru
        _
      %p213 = scmp.le.s32.totalorder 1, %s16
      %p214 = scmp.lt.s32.totalorder %s16, 3
      %p215 = pnand %p213, %p214
      %p216 = pneg %p215
      // Predicated region
      $region29: #{tpu_custom_call.1} parent=5 // pred_check
        _
      $region30: #{tpu_custom_call.1} parent=5 // pred_check_branch
        %218 = sbr.rel (%p215) target = $region32
      $region31: #{tpu_custom_call.1} parent=5 // pred_region
        %s219 = ssub.s32 %s16, 1
        // Predicated region
        $region33: #{tpu_custom_call.1} parent=31 // pred_check
          %p220 = pneg %p61
        $region34: #{tpu_custom_call.1} parent=31 // pred_check_branch
          %222 = sbr.rel (%p220) target = $region36
        $region35: #{tpu_custom_call.1} parent=31 // pred_region
          %223 = dma.done [#allocation3], 256
        $region36: #{tpu_custom_call.1} parent=31 // pred_fallthru
          _
        %s224 = sand.u32 %s76, 1
        %s225 = scalar_lea.sflag [#allocation6], %s224
        %s226 = sand.u32 %s76, 1
        %s227 = smul.addr %s226, 32
        %s228 = scalar_lea.vmem [#allocation5], %s227
        // Predicated region
        $region37: #{tpu_custom_call.1} parent=31 // pred_check
          %p229 = pneg %p89
        $region38: #{tpu_custom_call.1} parent=31 // pred_check_branch
          %231 = sbr.rel (%p229) target = $region40
        $region39: #{tpu_custom_call.1} parent=31 // pred_region
          %232 = dma.done %s225, 512
        $region40: #{tpu_custom_call.1} parent=31 // pred_fallthru
          _
        %p233 = pneg %p61
        %p234 = pneg %p58
        %s235 = sand.u32 %s76, 1
        %s236 = scalar_lea.sflag [#allocation6], %s235
        %s237 = sand.u32 %s76, 1
        %s238 = smul.addr %s237, 32
        %s239 = scalar_lea.vmem [#allocation5], %s238
        %p240 = pneg %p89
        %p241 = pneg %p86
        %p242 = scmp.lt.s32.totalorder %s27, 1
        %s243 = scalar_select %p242, %s27, 1
        %p244 = scmp.lt.s32.totalorder %s28, 0
        %s245 = scalar_select %p244, %s28, 0
        %s246 = sadd.s32 %s245, %s243
        %s247 = scalar_lea.vmem %s2, %s246
        %p248 = pneg %p117
        %p249 = pneg %p114
        %p250 = pneg %p147
        %p251 = pneg %p144
        %s252 = sand.u32 %s134, 1
        %s253 = scalar_lea.sflag [#allocation4], %s252
        %s254 = sand.u32 %s134, 1
        %s255 = smul.addr %s254, 16
        %s256 = scalar_lea.vmem [#allocation7], %s255
        %s257 = smul.u32 2, %s26
        %p258 = scmp.lt.s32.totalorder %s27, 1
        %s259 = scalar_select %p258, %s27, 1
        %p260 = scmp.lt.s32.totalorder %s28, 0
        %s261 = scalar_select %p260, %s28, 0
        %s262 = sadd.s32 %s261, %s259
        %s263 = scalar_lea.vmem %s2, %s262
        %s264 = sadd.s32 %s27, %s28
        %s265 = smul.u32 2, %s26
        %v266 = vld [vmem:[#allocation2] sm:$0xff]
        %v267 = vld [vmem:[#allocation2 + $0x8] sm:$0xff]
        %v268 = vld [vmem:[%s228] sm:$0xff]
        %v269 = vld [vmem:[%s228 + $0x8] sm:$0xff]
        %v270 = vld [vmem:[%s228 + $0x10] sm:$0xff]
        %v271 = vld [vmem:[%s228 + $0x18] sm:$0xff]
        %v272 = vld [vmem:[%s263] sm:$0x1]
        %v274 = vlaneseq
        %v275 = vshrl.u32 %v274, 7
        %v276 = vsub.s32 0, %v275
        %v277 = vrot.slane %v272, %v276
        %vm279 = vcmask 261120
        %v281 = vsel %vm279, %v266, 0
        %v284 = vsel %vm279, %v267, 0
        %286 = vmatprep.subr.mxu0 0.0
        %287 = vmatpush1.msra.mxu0 %v268
        %288 = vmatprep.subr.mxu0 0.0
        %289 = vmatpush1.msra.mxu0 %v269
        %290 = vmatprep.subr.mxu0 0.0
        %291 = vmatpush1.msra.mxu0 %v270
        %292 = vmatprep.subr.mxu0 0.0
        %293 = vmatpush1.msra.mxu0 %v271
        %294 = vmatprep.subr.mxu0 0.0
        %295 = vmatpush1.msra.mxu0 0.0
        %296 = vmatprep.subr.mxu0 0.0
        %297 = vmatpush1.msra.mxu0 0.0
        %298 = vmatprep.subr.mxu0 0.0
        %299 = vmatpush1.msra.mxu0 0.0
        %300 = vmatprep.subr.mxu0 0.0
        %301 = vmatpush1.msra.mxu0 0.0
        %302 = vmatprep.subr.mxu0 0.0
        %303 = vmatpush1.msra.mxu0 0.0
        %304 = vmatprep.subr.mxu0 0.0
        %305 = vmatpush1.msra.mxu0 0.0
        %306 = vmatprep.subr.mxu0 0.0
        %307 = vmatpush1.msra.mxu0 0.0
        %308 = vmatprep.subr.mxu0 0.0
        %309 = vmatpush1.msra.mxu0 0.0
        %310 = vmatprep.subr.mxu0 0.0
        %311 = vmatpush1.msra.mxu0 0.0
        %312 = vmatprep.subr.mxu0 0.0
        %313 = vmatpush1.msra.mxu0 0.0
        %314 = vmatprep.subr.mxu0 0.0
        %315 = vmatpush1.msra.mxu0 0.0
        %316 = vmatprep.subr.mxu0 0.0
        %317 = vmatpush1.msra.mxu0 0.0
        %318 = vmatprep.subr.mxu0 0.0
        %319 = vmatpush1.msra.mxu0 0.0
        %320 = vmatprep.subr.mxu0 0.0
        %321 = vmatpush1.msra.mxu0 0.0
        %322 = vmatprep.subr.mxu0 0.0
        %323 = vmatpush1.msra.mxu0 0.0
        %324 = vmatprep.subr.mxu0 0.0
        %325 = vmatpush1.msra.mxu0 0.0
        %326 = vmatprep.subr.mxu0 0.0
        %327 = vmatpush1.msra.mxu0 0.0
        %328 = vmatprep.subr.mxu0 0.0
        %329 = vmatpush1.msra.mxu0 0.0
        %330 = vmatprep.subr.mxu0 0.0
        %331 = vmatpush1.msra.mxu0 0.0
        %332 = vmatprep.subr.mxu0 0.0
        %333 = vmatpush1.msra.mxu0 0.0
        %334 = vmatprep.subr.mxu0 0.0
        %335 = vmatpush1.msra.mxu0 0.0
        %336 = vmatprep.subr.mxu0 0.0
        %337 = vmatpush1.msra.mxu0 0.0
        %338 = vmatprep.subr.mxu0 0.0
        %339 = vmatpush1.msra.mxu0 0.0
        %340 = vmatprep.subr.mxu0 0.0
        %341 = vmatpush1.msra.mxu0 0.0
        %342 = vmatprep.subr.mxu0 0.0
        %343 = vmatpush1.msra.mxu0 0.0
        %344 = vmatprep.subr.mxu0 0.0
        %345 = vmatpush1.msra.mxu0 0.0
        %346 = vmatprep.subr.mxu0 0.0
        %347 = vmatpush1.msra.mxu0 0.0
        %348 = vmatprep.subr.mxu0 0.0
        %349 = vmatpush1.msra.mxu0 0.0
        %350 = vmatprep.mubr.f32.mxu0 0.0
        %351 = vmatmul.mubr.f32.gmra.mrb[0].mxu0 %v281
        %v352 = vpop.f32.mrb[0].mxu0
        %v353 = vadd.f32 %v277, %v352
        %v354 = vpop.f32.mrb[0].mxu0
        %355 = vmatprep.mubr.f32.mxu0 0.0
        %356 = vmatmul.mubr.f32.gmra.mrb[0].mxu0 %v284
        %v357 = vpop.f32.mrb[0].mxu0
        %v358 = vadd.f32 %v277, %v357
        %v359 = vpop.f32.mrb[0].mxu0
        %360 = vdwg.mxu0
        %361 = vst [vmem:[%s256] sm:$0xff] %v353
        %362 = vst [vmem:[%s256 + $0x8] sm:$0xff] %v358
        %s363 = sand.u32 %s134, 1
        %s364 = scalar_lea.sflag [#allocation4], %s363
        %s365 = sand.u32 %s134, 1
        %s366 = smul.addr %s365, 16
        %s367 = scalar_lea.vmem [#allocation7], %s366
        // Predicated region
        $region41: #{tpu_custom_call.1} parent=31 // pred_check
          %p368 = pneg %p144
        $region42: #{tpu_custom_call.1} parent=31 // pred_check_branch
          %370 = sbr.rel (%p368) target = $region44
        $region43: #{tpu_custom_call.1} parent=31 // pred_region
          %s371 = sadd.s32 %s27, %s28
          %s372 = smul.u32 2, %s26
          %s374 = ssub.s32 256, 256
          %375 = vsyncadd %s364, %s374
          %s376 = smul.addr %s372, 2
          %s377 = sadd.s32 %s371, %s376
          %s378 = smul.addr %s377, 128
          %s379 = scalar_lea.hbm %s3, %s378
          %s380 = sshll.u32 %s367, 4
          %s381 = int_to_ptr.vmem [resolvable:$true] %s380
          %386 = dma.vmem_to_hbm [thread:$0]  %s381, 256, %s379, %s364, 128, 256, 8
        $region44: #{tpu_custom_call.1} parent=31 // pred_fallthru
          _
      $region32: #{tpu_custom_call.1} parent=5 // pred_fallthru
        _
      %p387 = scmp.le.s32.totalorder 2, %s16
      // Predicated region
      $region45: #{tpu_custom_call.1} parent=5 // pred_check
        %p388 = pneg %p387
      $region46: #{tpu_custom_call.1} parent=5 // pred_check_branch
        %390 = sbr.rel (%p388) target = $region48
      $region47: #{tpu_custom_call.1} parent=5 // pred_region
        %s391 = ssub.s32 %s16, 2
        // Predicated region
        $region49: #{tpu_custom_call.1} parent=47 // pred_check
          %p392 = pneg %p150
        $region50: #{tpu_custom_call.1} parent=47 // pred_check_branch
          %394 = sbr.rel (%p392) target = $region52
        $region51: #{tpu_custom_call.1} parent=47 // pred_region
          %s395 = sand.u32 %s135, 1
          %s396 = scalar_lea.sflag [#allocation4], %s395
          %s397 = sand.u32 %s135, 1
          %s398 = smul.addr %s397, 16
          %s399 = scalar_lea.vmem [#allocation7], %s398
          %400 = dma.done %s396, 256
        $region52: #{tpu_custom_call.1} parent=47 // pred_fallthru
          _
      $region48: #{tpu_custom_call.1} parent=5 // pred_fallthru
        _
    $region6: #{tpu_custom_call.1} parent=1 // loop_footer
      %s20 = sadd.s32 1, %s16
    $region7: #{tpu_custom_call.1} parent=1 // loop_footer_branch
      %15 = sbr.rel target = $region3
    $region8: #{tpu_custom_call.1} parent=1 // loop_exit
      _
    %401 = vsyncpa [#allocation3], 1
    %s402 = scalar_lea.sflag [#allocation3], 1
    %403 = vsyncpa %s402, 1
    %404 = vsyncpa [#allocation6], 1
    %s405 = scalar_lea.sflag [#allocation6], 1
    %406 = vsyncpa %s405, 1
    %407 = vsyncpa [#allocation4], 1
    %s408 = scalar_lea.sflag [#allocation4], 1
    %409 = vsyncpa %s408, 1

</llo_original>
